<compile_context>
chip_gen: v6e
topology: v6e:2x2x1
jax: 0.10.0
libtpu: 0.0.40
codegen_flags: <defaults>
</compile_context>

<pallas_src>
import jax
import jax.numpy as jnp
from jax.experimental import pallas as pl
from jax.experimental.pallas import tpu as pltpu


LANE = 128      # TPU lane width (last dim)
SUBLANE = 8     # f32 sublane width (second-to-last dim)
NEG_INF = -1e30


def _round_up(x, m):
    return (x + m - 1) // m * m


def actor_mlp_kernel(x_ref, w1_ref, b1_ref, w2_ref, b2_ref, w3_ref, b3_ref,
                     probs_ref):
    """One (tm, K) batch tile -> (tm, Np) softmax probabilities."""
    x = x_ref[...].astype(jnp.bfloat16)                                  # (tm, K)

    # fc1 + ReLU  (bf16 operands, f32 accumulation, f32 elementwise)
    h1 = jnp.dot(x, w1_ref[...], preferred_element_type=jnp.float32) + b1_ref[...]
    h1 = jnp.maximum(h1, 0.0)

    # fc2 + ReLU
    h2 = jnp.dot(h1.astype(jnp.bfloat16), w2_ref[...],
                 preferred_element_type=jnp.float32) + b2_ref[...]
    h2 = jnp.maximum(h2, 0.0)

    # fc3 (logits); padded action columns carry bias -1e30 -> exp() == 0
    logits = jnp.dot(h2.astype(jnp.bfloat16), w3_ref[...],
                     preferred_element_type=jnp.float32) + b3_ref[...]

    # numerically-stable softmax over the lane-padded action dim
    m = jnp.max(logits, axis=-1, keepdims=True)
    e = jnp.exp(logits - m)
    denom = jnp.sum(e, axis=-1, keepdims=True)
    probs_ref[...] = (e * pl.reciprocal(denom, approx=True)).astype(probs_ref.dtype)


def actor_forward(state, params, n_actions, *, block_b=512):
    """state: (B, input_dims) f32. Returns Categorical probs (B, n_actions) f32."""
    w1, b1, w2, b2, w3, b3 = params          # pre-padded; weights bf16, biases f32
    B, in_dims = state.shape
    K = w1.shape[0]                          # padded contraction dim (mult of 128)
    fc1 = w1.shape[1]
    fc2 = w2.shape[1]
    Np = w3.shape[1]                         # lane-padded action dim (mult of 128)

    # Batch tile: sublane-pad tiny batches, cap at block_b for rollout-scale B.
    tm = min(block_b, _round_up(B, SUBLANE))
    Bp = _round_up(B, tm)

    # Zero-pad batch rows / input features (zero cols x zero weight rows = no-op).
    if Bp != B or K != in_dims:
        x = jnp.zeros((Bp, K), state.dtype).at[:B, :in_dims].set(state)
    else:
        x = state

    grid = (Bp // tm,)
    resident = lambda shape: pl.BlockSpec(shape, lambda i: (0, 0))  # stays in VMEM

    probs = pl.pallas_call(
        actor_mlp_kernel,
        out_shape=jax.ShapeDtypeStruct((Bp, Np), jnp.float32),
        grid=grid,
        in_specs=[
            pl.BlockSpec((tm, K), lambda i: (i, 0)),     # x: tiled over batch
            resident((K, fc1)), resident((1, fc1)),      # fc1 W/b (VMEM-resident)
            resident((fc1, fc2)), resident((1, fc2)),    # fc2 W/b
            resident((fc2, Np)), resident((1, Np)),      # fc3 W/b (lane-padded)
        ],
        out_specs=pl.BlockSpec((tm, Np), lambda i: (i, 0)),
        compiler_params=pltpu.CompilerParams(
            dimension_semantics=("parallel",)),          # shard batch tiles across TCs
    )(x, w1, b1, w2, b2, w3, b3)

    # TODO(synk): torch.distributions.Categorical (sampling / log_prob) has no
    # Pallas equivalent; we return the distribution's probability table.
    return probs[:B, :n_actions]


def init_params(key, input_dims, fc1_dims, fc2_dims, n_actions):
    """nn.Linear-style init; weights stored as (in, out) == torch_weight.T."""
    ks = jax.random.split(key, 6)

    def lin(kw, kb, fan_in, fan_out):
        bound = 1.0 / jnp.sqrt(fan_in)
        w = jax.random.uniform(kw, (fan_in, fan_out), jnp.float32, -bound, bound)
        b = jax.random.uniform(kb, (1, fan_out), jnp.float32, -bound, bound)
        return w, b

    w1, b1 = lin(ks[0], ks[1], input_dims, fc1_dims)
    w2, b2 = lin(ks[2], ks[3], fc1_dims, fc2_dims)
    w3, b3 = lin(ks[4], ks[5], fc2_dims, n_actions)
    return (w1, b1, w2, b2, w3, b3)


def prepare_params(raw_params):
    """Pad for TPU lane layout; weights -> bf16, biases stay f32.

    - fc1 contraction dim padded to a multiple of 128 with zero rows.
    - fc3 action dim padded to a multiple of 128: zero weight cols, bias -1e30
      on padded entries so their softmax probability is exactly 0.
    """
    w1, b1, w2, b2, w3, b3 = raw_params
    in_dims, fc1 = w1.shape
    fc2, n_act = w3.shape

    Kp = _round_up(in_dims, LANE)
    Np = _round_up(n_act, LANE)

    w1p = jnp.zeros((Kp, fc1), jnp.float32).at[:in_dims, :].set(w1)
    w3p = jnp.zeros((fc2, Np), jnp.float32).at[:, :n_act].set(w3)
    b3p = jnp.full((1, Np), NEG_INF, jnp.float32).at[:, :n_act].set(b3)

    return (w1p.astype(jnp.bfloat16), b1,
            w2.astype(jnp.bfloat16), b2,
            w3p.astype(jnp.bfloat16), b3p)


if __name__ == "__main__":
    B = 4
    input_dims = 64
    fc1_dims = 256
    fc2_dims = 256
    n_actions = 8

    key = jax.random.PRNGKey(0)
    k_params, k_state = jax.random.split(key)

    raw_params = init_params(k_params, input_dims, fc1_dims, fc2_dims, n_actions)
    params = prepare_params(raw_params)

    # extractor = identity, torch.flatten(_, 1) -> state is already (B, input_dims)
    state = jax.random.normal(k_state, (B, input_dims), jnp.float32)

    probs = actor_forward(state, params, n_actions)
    probs = jax.block_until_ready(probs)

    # sanity: rows of a Categorical probability table sum to 1 (bf16 matmul
    # inputs + EUP approx reciprocal -> tolerance ~1e-3)
    assert probs.shape == (B, n_actions)
    assert bool(jnp.all(jnp.abs(jnp.sum(probs, axis=-1) - 1.0) < 2e-3))
    assert bool(jnp.all(probs >= 0.0))

    print("KERNEL_OK")
</pallas_src>

<mosaic_0001>
module attributes {stable_mosaic.version = 11 : i64} {
  func.func @actor_mlp_kernel(%arg0: i32, %arg1: memref<8x128xf32, #tpu.memory_space<vmem>>, %arg2: memref<128x256xbf16, #tpu.memory_space<vmem>>, %arg3: memref<1x256xf32, #tpu.memory_space<vmem>>, %arg4: memref<256x256xbf16, #tpu.memory_space<vmem>>, %arg5: memref<1x256xf32, #tpu.memory_space<vmem>>, %arg6: memref<256x128xbf16, #tpu.memory_space<vmem>>, %arg7: memref<1x128xf32, #tpu.memory_space<vmem>>, %arg8: memref<8x128xf32, #tpu.memory_space<vmem>>) attributes {dimension_semantics = [#tpu.dimension_semantics<parallel>], iteration_bounds = array<i64: 1>, scalar_prefetch = 0 : i64, scratch_operands = 0 : i64, tpu.core_type = #tpu.core_type<tc>, window_params = [{transform_indices = @transform_0, window_bounds = array<i64: 8, 128>}, {pipeline_mode = #tpu.pipeline_mode<synchronous>, transform_indices = @transform_1, window_bounds = array<i64: 128, 256>}, {pipeline_mode = #tpu.pipeline_mode<synchronous>, transform_indices = @transform_2, window_bounds = array<i64: 1, 256>}, {pipeline_mode = #tpu.pipeline_mode<synchronous>, transform_indices = @transform_3, window_bounds = array<i64: 256, 256>}, {pipeline_mode = #tpu.pipeline_mode<synchronous>, transform_indices = @transform_4, window_bounds = array<i64: 1, 256>}, {pipeline_mode = #tpu.pipeline_mode<synchronous>, transform_indices = @transform_5, window_bounds = array<i64: 256, 128>}, {pipeline_mode = #tpu.pipeline_mode<synchronous>, transform_indices = @transform_6, window_bounds = array<i64: 1, 128>}, {transform_indices = @transform_7, window_bounds = array<i64: 8, 128>}]} {
    %c0 = arith.constant 0 : index
    %c0_0 = arith.constant 0 : index
    %0 = vector.load %arg1[%c0, %c0_0] : memref<8x128xf32, #tpu.memory_space<vmem>>, vector<8x128xf32>
    %1 = arith.truncf %0 : vector<8x128xf32> to vector<8x128xbf16>
    %c0_1 = arith.constant 0 : index
    %c0_2 = arith.constant 0 : index
    %2 = vector.load %arg2[%c0_1, %c0_2] : memref<128x256xbf16, #tpu.memory_space<vmem>>, vector<128x256xbf16>
    %cst = arith.constant dense<0.000000e+00> : vector<8x256xf32>
    %3 = tpu.matmul %1, %2, %cst {dimension_numbers = #tpu.dot_dimension_numbers<[1], [0], [0], [1], [0, 0, 1, 1], [], []>} : vector<8x128xbf16>, vector<128x256xbf16>, vector<8x256xf32> -> vector<8x256xf32>
    %c0_3 = arith.constant 0 : index
    %c0_4 = arith.constant 0 : index
    %4 = vector.load %arg3[%c0_3, %c0_4] : memref<1x256xf32, #tpu.memory_space<vmem>>, vector<1x256xf32>
    %5 = vector.broadcast %4 : vector<1x256xf32> to vector<8x256xf32>
    %6 = arith.addf %3, %5 : vector<8x256xf32>
    %cst_5 = arith.constant 0.000000e+00 : f32
    %7 = vector.broadcast %cst_5 : f32 to vector<8x256xf32>
    %8 = arith.maximumf %6, %7 : vector<8x256xf32>
    %9 = arith.truncf %8 : vector<8x256xf32> to vector<8x256xbf16>
    %c0_6 = arith.constant 0 : index
    %c0_7 = arith.constant 0 : index
    %10 = vector.load %arg4[%c0_6, %c0_7] : memref<256x256xbf16, #tpu.memory_space<vmem>>, vector<256x256xbf16>
    %cst_8 = arith.constant dense<0.000000e+00> : vector<8x256xf32>
    %11 = tpu.matmul %9, %10, %cst_8 {dimension_numbers = #tpu.dot_dimension_numbers<[1], [0], [0], [1], [0, 0, 1, 1], [], []>} : vector<8x256xbf16>, vector<256x256xbf16>, vector<8x256xf32> -> vector<8x256xf32>
    %c0_9 = arith.constant 0 : index
    %c0_10 = arith.constant 0 : index
    %12 = vector.load %arg5[%c0_9, %c0_10] : memref<1x256xf32, #tpu.memory_space<vmem>>, vector<1x256xf32>
    %13 = vector.broadcast %12 : vector<1x256xf32> to vector<8x256xf32>
    %14 = arith.addf %11, %13 : vector<8x256xf32>
    %cst_11 = arith.constant 0.000000e+00 : f32
    %15 = vector.broadcast %cst_11 : f32 to vector<8x256xf32>
    %16 = arith.maximumf %14, %15 : vector<8x256xf32>
    %17 = arith.truncf %16 : vector<8x256xf32> to vector<8x256xbf16>
    %c0_12 = arith.constant 0 : index
    %c0_13 = arith.constant 0 : index
    %18 = vector.load %arg6[%c0_12, %c0_13] : memref<256x128xbf16, #tpu.memory_space<vmem>>, vector<256x128xbf16>
    %cst_14 = arith.constant dense<0.000000e+00> : vector<8x128xf32>
    %19 = tpu.matmul %17, %18, %cst_14 {dimension_numbers = #tpu.dot_dimension_numbers<[1], [0], [0], [1], [0, 0, 1, 1], [], []>} : vector<8x256xbf16>, vector<256x128xbf16>, vector<8x128xf32> -> vector<8x128xf32>
    %c0_15 = arith.constant 0 : index
    %c0_16 = arith.constant 0 : index
    %20 = vector.load %arg7[%c0_15, %c0_16] : memref<1x128xf32, #tpu.memory_space<vmem>>, vector<1x128xf32>
    %21 = vector.broadcast %20 : vector<1x128xf32> to vector<8x128xf32>
    %22 = arith.addf %19, %21 : vector<8x128xf32>
    %cst_17 = arith.constant dense<0xFF800000> : vector<8xf32>
    %23 = vector.multi_reduction <maximumf>, %22, %cst_17 [1] : vector<8x128xf32> to vector<8xf32>
    %24 = vector.shape_cast %23 : vector<8xf32> to vector<8x1xf32>
    %25 = vector.broadcast %24 : vector<8x1xf32> to vector<8x128xf32>
    %26 = arith.subf %22, %25 : vector<8x128xf32>
    %27 = math.exp %26 : vector<8x128xf32>
    %cst_18 = arith.constant dense<0.000000e+00> : vector<8xf32>
    %28 = vector.multi_reduction <add>, %27, %cst_18 [1] : vector<8x128xf32> to vector<8xf32>
    %29 = vector.shape_cast %28 : vector<8xf32> to vector<8x1xf32>
    %30 = tpu.reciprocal %29 {approx = true} : vector<8x1xf32> -> vector<8x1xf32>
    %31 = vector.broadcast %30 : vector<8x1xf32> to vector<8x128xf32>
    %32 = arith.mulf %27, %31 : vector<8x128xf32>
    %c0_19 = arith.constant 0 : index
    %c0_20 = arith.constant 0 : index
    %33 = vector.load %arg8[%c0_19, %c0_20] : memref<8x128xf32, #tpu.memory_space<vmem>>, vector<8x128xf32>
    tpu.vector_store %arg8[%c0_19, %c0_20], %32 {strides = array<i32>} : memref<8x128xf32, #tpu.memory_space<vmem>>, vector<8x128xf32>,
    return
  }
  func.func @transform_0(%arg0: i32) -> (i32, i32) {
    %c0_i32 = arith.constant 0 : i32
    %c0_i32_0 = arith.constant 0 : i32
    return %arg0, %c0_i32 : i32, i32
  }
  func.func @transform_1(%arg0: i32) -> (i32, i32) {
    %c0_i32 = arith.constant 0 : i32
    %c0_i32_0 = arith.constant 0 : i32
    %c0_i32_1 = arith.constant 0 : i32
    return %c0_i32, %c0_i32_0 : i32, i32
  }
  func.func @transform_2(%arg0: i32) -> (i32, i32) {
    %c0_i32 = arith.constant 0 : i32
    %c0_i32_0 = arith.constant 0 : i32
    %c0_i32_1 = arith.constant 0 : i32
    return %c0_i32, %c0_i32_0 : i32, i32
  }
  func.func @transform_3(%arg0: i32) -> (i32, i32) {
    %c0_i32 = arith.constant 0 : i32
    %c0_i32_0 = arith.constant 0 : i32
    %c0_i32_1 = arith.constant 0 : i32
    return %c0_i32, %c0_i32_0 : i32, i32
  }
  func.func @transform_4(%arg0: i32) -> (i32, i32) {
    %c0_i32 = arith.constant 0 : i32
    %c0_i32_0 = arith.constant 0 : i32
    %c0_i32_1 = arith.constant 0 : i32
    return %c0_i32, %c0_i32_0 : i32, i32
  }
  func.func @transform_5(%arg0: i32) -> (i32, i32) {
    %c0_i32 = arith.constant 0 : i32
    %c0_i32_0 = arith.constant 0 : i32
    %c0_i32_1 = arith.constant 0 : i32
    return %c0_i32, %c0_i32_0 : i32, i32
  }
  func.func @transform_6(%arg0: i32) -> (i32, i32) {
    %c0_i32 = arith.constant 0 : i32
    %c0_i32_0 = arith.constant 0 : i32
    %c0_i32_1 = arith.constant 0 : i32
    return %c0_i32, %c0_i32_0 : i32, i32
  }
  func.func @transform_7(%arg0: i32) -> (i32, i32) {
    %c0_i32 = arith.constant 0 : i32
    %c0_i32_0 = arith.constant 0 : i32
    return %arg0, %c0_i32 : i32, i32
  }
}

</mosaic_0001>

<llo_original>
// kernel: tpu_custom_call.1
$region0: #{tpu_custom_call.1}
  #allocation0 [shape = 'u32[]', space=smem, size = 0x4, offset = 0x4, fixed_abs, tag = 'smem constant byte address 0x4 - core index']
  #allocation1 [shape = 'u32[144,128]{1,0:T(1,128)}', space=vmem, size = 0x12000, scoped, tag = 'internal scratch']
  %s0 = inlined_call_operand.hbm [shape: f32[8,128], index: 0, kind: input, shape index: {}]
  %s1 = inlined_call_operand.hbm [shape: bf16[128,256], index: 1, kind: input, shape index: {}]
  %s2 = inlined_call_operand.vmem [shape: f32[1,256], index: 2, kind: input, shape index: {}]
  %s3 = inlined_call_operand.hbm [shape: bf16[256,256], index: 3, kind: input, shape index: {}]
  %s4 = inlined_call_operand.vmem [shape: f32[1,256], index: 4, kind: input, shape index: {}]
  %s5 = inlined_call_operand.hbm [shape: bf16[256,128], index: 5, kind: input, shape index: {}]
  %s6 = inlined_call_operand.vmem [shape: f32[1,128], index: 6, kind: input, shape index: {}]
  %s7 = inlined_call_operand.hbm [shape: f32[8,128], index: 7, kind: output, shape index: {}]
  %s8 = sld [smem:[#allocation0]]
  $region54: #{tpu_custom_call.1} parent=0
    _
  %s10 = ssub.s32 1, %s8
  %s11 = scalar_select 0, %s10, %s8
  $region1: #{tpu_custom_call.1} parent=0
    #allocation2 [shape = 'u8[4096]{0}', space=vmem, size = 0x1000, scoped, tag = 'input window, operand 0, single buffered']
    #allocation3 [shape = 's32[1]{0}', space=sflag, size = 0x4, scoped, tag = 'scoped memory for tpu_custom_call.1']
    #allocation4 [shape = 's32[1]{0}', space=sflag, size = 0x4, scoped, tag = 'scoped memory for tpu_custom_call.1']
    #allocation5 [shape = 'u8[65536]{0}', space=vmem, size = 0x10000, scoped, tag = 'input window, operand 1, single buffered']
    #allocation6 [shape = 's32[1]{0}', space=sflag, size = 0x4, scoped, tag = 'scoped memory for tpu_custom_call.1']
    #allocation7 [shape = 'u8[131072]{0}', space=vmem, size = 0x20000, scoped, tag = 'input window, operand 3, single buffered']
    #allocation8 [shape = 'u8[65536]{0}', space=vmem, size = 0x10000, scoped, tag = 'input window, operand 5, single buffered']
    #allocation9 [shape = 's32[1]{0}', space=sflag, size = 0x4, scoped, tag = 'scoped memory for tpu_custom_call.1']
    #allocation10 [shape = 'u8[4096]{0}', space=vmem, size = 0x1000, scoped, tag = 'output window, operand 0, single buffered']
    %12 = vsyncpa [#allocation3], 0
    %13 = vsyncpa [#allocation6], 0
    %14 = vsyncpa [#allocation9], 0
    %15 = vsyncpa [#allocation4], 0
    // Predicated region
    $region2: #{tpu_custom_call.1} parent=1 // pred_check
      _
    $region3: #{tpu_custom_call.1} parent=1 // pred_check_branch
      %17 = sbr.rel (0) target = $region5
    $region4: #{tpu_custom_call.1} parent=1 // pred_region
      %s19 = ssub.s32 128, 128
      %20 = vsyncadd [#allocation3], %s19
      %s22 = sshll.u32 [#allocation2], 4
      %s23 = int_to_ptr.vmem [resolvable:$true] %s22
      %25 = dma.hbm_to_vmem [thread:$0]  %s0, 128, %s23, [#allocation3]
    $region5: #{tpu_custom_call.1} parent=1 // pred_fallthru
      _
    // Predicated region
    $region6: #{tpu_custom_call.1} parent=1 // pred_check
      _
    $region7: #{tpu_custom_call.1} parent=1 // pred_check_branch
      %27 = sbr.rel (0) target = $region9
    $region8: #{tpu_custom_call.1} parent=1 // pred_region
      %s29 = ssub.s32 2048, 2048
      %30 = vsyncadd [#allocation6], %s29
      %s31 = sshll.u32 [#allocation5], 4
      %s32 = int_to_ptr.vmem [resolvable:$true] %s31
      %37 = dma.hbm_to_vmem [thread:$0]  %s1, 2048, %s32, [#allocation6], 128, 128, 8
    $region9: #{tpu_custom_call.1} parent=1 // pred_fallthru
      _
    // Predicated region
    $region10: #{tpu_custom_call.1} parent=1 // pred_check
      _
    $region11: #{tpu_custom_call.1} parent=1 // pred_check_branch
      %39 = sbr.rel (0) target = $region13
    $region12: #{tpu_custom_call.1} parent=1 // pred_region
      _
    $region13: #{tpu_custom_call.1} parent=1 // pred_fallthru
      _
    // Predicated region
    $region14: #{tpu_custom_call.1} parent=1 // pred_check
      _
    $region15: #{tpu_custom_call.1} parent=1 // pred_check_branch
      %41 = sbr.rel (0) target = $region17
    $region16: #{tpu_custom_call.1} parent=1 // pred_region
      %s43 = ssub.s32 4096, 4096
      %44 = vsyncadd [#allocation6], %s43
      %s45 = sshll.u32 [#allocation7], 4
      %s46 = int_to_ptr.vmem [resolvable:$true] %s45
      %51 = dma.hbm_to_vmem [thread:$0]  %s3, 4096, %s46, [#allocation6], 128, 128, 8
    $region17: #{tpu_custom_call.1} parent=1 // pred_fallthru
      _
    // Predicated region
    $region18: #{tpu_custom_call.1} parent=1 // pred_check
      _
    $region19: #{tpu_custom_call.1} parent=1 // pred_check_branch
      %53 = sbr.rel (0) target = $region21
    $region20: #{tpu_custom_call.1} parent=1 // pred_region
      _
    $region21: #{tpu_custom_call.1} parent=1 // pred_fallthru
      _
    // Predicated region
    $region22: #{tpu_custom_call.1} parent=1 // pred_check
      _
    $region23: #{tpu_custom_call.1} parent=1 // pred_check_branch
      %55 = sbr.rel (0) target = $region25
    $region24: #{tpu_custom_call.1} parent=1 // pred_region
      %s57 = ssub.s32 2048, 2048
      %58 = vsyncadd [#allocation9], %s57
      %s59 = sshll.u32 [#allocation8], 4
      %s60 = int_to_ptr.vmem [resolvable:$true] %s59
      %65 = dma.hbm_to_vmem [thread:$0]  %s5, 2048, %s60, [#allocation9], 64, 64, 4
    $region25: #{tpu_custom_call.1} parent=1 // pred_fallthru
      _
    // Predicated region
    $region26: #{tpu_custom_call.1} parent=1 // pred_check
      _
    $region27: #{tpu_custom_call.1} parent=1 // pred_check_branch
      %67 = sbr.rel (0) target = $region29
    $region28: #{tpu_custom_call.1} parent=1 // pred_region
      _
    $region29: #{tpu_custom_call.1} parent=1 // pred_fallthru
      _
    // Predicated region
    $region30: #{tpu_custom_call.1} parent=1 // pred_check
      _
    $region31: #{tpu_custom_call.1} parent=1 // pred_check_branch
      %69 = sbr.rel (0) target = $region33
    $region32: #{tpu_custom_call.1} parent=1 // pred_region
      %70 = dma.done [#allocation3], 128
    $region33: #{tpu_custom_call.1} parent=1 // pred_fallthru
      _
    // Predicated region
    $region34: #{tpu_custom_call.1} parent=1 // pred_check
      _
    $region35: #{tpu_custom_call.1} parent=1 // pred_check_branch
      %72 = sbr.rel (0) target = $region37
    $region36: #{tpu_custom_call.1} parent=1 // pred_region
      %73 = dma.done [#allocation6], 2048
    $region37: #{tpu_custom_call.1} parent=1 // pred_fallthru
      _
    // Predicated region
    $region38: #{tpu_custom_call.1} parent=1 // pred_check
      _
    $region39: #{tpu_custom_call.1} parent=1 // pred_check_branch
      %75 = sbr.rel (0) target = $region41
    $region40: #{tpu_custom_call.1} parent=1 // pred_region
      %76 = dma.done [#allocation6], 4096
    $region41: #{tpu_custom_call.1} parent=1 // pred_fallthru
      _
    // Predicated region
    $region42: #{tpu_custom_call.1} parent=1 // pred_check
      _
    $region43: #{tpu_custom_call.1} parent=1 // pred_check_branch
      %78 = sbr.rel (0) target = $region45
    $region44: #{tpu_custom_call.1} parent=1 // pred_region
      %79 = dma.done [#allocation9], 2048
    $region45: #{tpu_custom_call.1} parent=1 // pred_fallthru
      _
    %v81 = vld [vmem:[#allocation2] sm:$0xff]
    %v82 = vpack.c.bf16 %v81, %v81
    %v83 = vld [vmem:[#allocation5] sm:$0xff]
    %v84 = vld [vmem:[#allocation5 + $0x8] sm:$0xff]
    %v85 = vld [vmem:[#allocation5 + $0x10] sm:$0xff]
    %v86 = vld [vmem:[#allocation5 + $0x18] sm:$0xff]
    %v87 = vld [vmem:[#allocation5 + $0x20] sm:$0xff]
    %v88 = vld [vmem:[#allocation5 + $0x28] sm:$0xff]
    %v89 = vld [vmem:[#allocation5 + $0x30] sm:$0xff]
    %v90 = vld [vmem:[#allocation5 + $0x38] sm:$0xff]
    %v91 = vld [vmem:[#allocation5 + $0x40] sm:$0xff]
    %v92 = vld [vmem:[#allocation5 + $0x48] sm:$0xff]
    %v93 = vld [vmem:[#allocation5 + $0x50] sm:$0xff]
    %v94 = vld [vmem:[#allocation5 + $0x58] sm:$0xff]
    %v95 = vld [vmem:[#allocation5 + $0x60] sm:$0xff]
    %v96 = vld [vmem:[#allocation5 + $0x68] sm:$0xff]
    %v97 = vld [vmem:[#allocation5 + $0x70] sm:$0xff]
    %v98 = vld [vmem:[#allocation5 + $0x78] sm:$0xff]
    %v99 = vld [vmem:[%s2] sm:$0x3]
    %v101 = vlaneseq
    %v102 = vshrl.u32 %v101, 7
    %v103 = vsub.s32 0, %v102
    %v104 = vrot.slane %v99, %v103
    %v105 = vlaneseq
    %v106 = vshrl.u32 %v105, 7
    %v107 = vsub.s32 1, %v106
    %v108 = vrot.slane %v99, %v107
    %v127 = vunpack.c.l.b16 %v83
    %v128 = vunpack.c.h.b16 %v83
    %v129 = vunpack.c.l.b16 %v84
    %v130 = vunpack.c.h.b16 %v84
    %v131 = vunpack.c.l.b16 %v85
    %v132 = vunpack.c.h.b16 %v85
    %v133 = vunpack.c.l.b16 %v86
    %v134 = vunpack.c.h.b16 %v86
    %v135 = vunpack.c.l.b16 %v87
    %v136 = vunpack.c.h.b16 %v87
    %v137 = vunpack.c.l.b16 %v88
    %v138 = vunpack.c.h.b16 %v88
    %v139 = vunpack.c.l.b16 %v89
    %v140 = vunpack.c.h.b16 %v89
    %v141 = vunpack.c.l.b16 %v90
    %v142 = vunpack.c.h.b16 %v90
    %v143 = vunpack.c.l.b16 %v91
    %v144 = vunpack.c.h.b16 %v91
    %v145 = vunpack.c.l.b16 %v92
    %v146 = vunpack.c.h.b16 %v92
    %v147 = vunpack.c.l.b16 %v93
    %v148 = vunpack.c.h.b16 %v93
    %v149 = vunpack.c.l.b16 %v94
    %v150 = vunpack.c.h.b16 %v94
    %v151 = vunpack.c.l.b16 %v95
    %v152 = vunpack.c.h.b16 %v95
    %v153 = vunpack.c.l.b16 %v96
    %v154 = vunpack.c.h.b16 %v96
    %v155 = vunpack.c.l.b16 %v97
    %v156 = vunpack.c.h.b16 %v97
    %v157 = vunpack.c.l.b16 %v98
    %v158 = vunpack.c.h.b16 %v98
    %v159 = vpack.c.b16 %v129, %v127
    %v160 = vpack.c.b16 %v130, %v128
    %v161 = vpack.c.b16 %v133, %v131
    %v162 = vpack.c.b16 %v134, %v132
    %v163 = vpack.c.b16 %v137, %v135
    %v164 = vpack.c.b16 %v138, %v136
    %v165 = vpack.c.b16 %v141, %v139
    %v166 = vpack.c.b16 %v142, %v140
    %v167 = vpack.c.b16 %v145, %v143
    %v168 = vpack.c.b16 %v146, %v144
    %v169 = vpack.c.b16 %v149, %v147
    %v170 = vpack.c.b16 %v150, %v148
    %v171 = vpack.c.b16 %v153, %v151
    %v172 = vpack.c.b16 %v154, %v152
    %v173 = vpack.c.b16 %v157, %v155
    %v174 = vpack.c.b16 %v158, %v156
    %191 = vmatprep.subr.bf16.mxu0 %v174
    %192 = vmatpush1.bf16.msra.mxu0 %v173
    %193 = vmatprep.subr.bf16.mxu0 %v172
    %194 = vmatpush1.bf16.msra.mxu0 %v171
    %195 = vmatprep.subr.bf16.mxu0 %v170
    %196 = vmatpush1.bf16.msra.mxu0 %v169
    %197 = vmatprep.subr.bf16.mxu0 %v168
    %198 = vmatpush1.bf16.msra.mxu0 %v167
    %199 = vmatprep.subr.bf16.mxu0 %v166
    %200 = vmatpush1.bf16.msra.mxu0 %v165
    %201 = vmatprep.subr.bf16.mxu0 %v164
    %202 = vmatpush1.bf16.msra.mxu0 %v163
    %203 = vmatprep.subr.bf16.mxu0 %v162
    %204 = vmatpush1.bf16.msra.mxu0 %v161
    %205 = vmatprep.subr.bf16.mxu0 %v160
    %206 = vmatpush1.bf16.msra.mxu0 %v159
    %207 = vmatprep.subr.bf16.mxu0 0
    %208 = vmatpush2.bf16.msra.mxu0 0
    %209 = vmatprep.subr.bf16.mxu0 0
    %210 = vmatpush2.bf16.msra.mxu0 0
    %211 = vmatprep.subr.bf16.mxu0 0
    %212 = vmatpush2.bf16.msra.mxu0 0
    %213 = vmatprep.subr.bf16.mxu0 0
    %214 = vmatpush2.bf16.msra.mxu0 0
    %215 = vmatprep.subr.bf16.mxu0 0
    %216 = vmatpush2.bf16.msra.mxu0 0
    %217 = vmatprep.subr.bf16.mxu0 0
    %218 = vmatpush2.bf16.msra.mxu0 0
    %219 = vmatprep.subr.bf16.mxu0 0
    %220 = vmatpush2.bf16.msra.mxu0 0
    %221 = vmatprep.subr.bf16.mxu0 0
    %222 = vmatpush2.bf16.msra.mxu0 0
    %223 = vmatprep.mubr.bf16.mxu0 0
    %224 = vmatmul.mubr.bf16.gmra.mxu0 %v82
    %v225 = vpop.f32.mrf.mxu0
    %v226 = vadd.f32 %v104, %v225
    %v227 = vpop.f32.mrf.mxu0
    %v228 = vadd.f32 %v108, %v227
    %v229 = vpop.f32.mrf.mxu0
    %v230 = vpop.f32.mrf.mxu0
    %231 = vdwg.mxu0
    %v232 = vmax.f32 %v226, 0.0
    %v233 = vmax.f32 %v228, 0.0
    %v234 = vpack.c.bf16 %v232, %v232
    %v235 = vpack.c.bf16 %v233, %v233
    %v236 = vld [vmem:[#allocation7] sm:$0xff]
    %v237 = vld [vmem:[#allocation7 + $0x8] sm:$0xff]
    %v238 = vld [vmem:[#allocation7 + $0x10] sm:$0xff]
    %v239 = vld [vmem:[#allocation7 + $0x18] sm:$0xff]
    %v240 = vld [vmem:[#allocation7 + $0x20] sm:$0xff]
    %v241 = vld [vmem:[#allocation7 + $0x28] sm:$0xff]
    %v242 = vld [vmem:[#allocation7 + $0x30] sm:$0xff]
    %v243 = vld [vmem:[#allocation7 + $0x38] sm:$0xff]
    %v244 = vld [vmem:[#allocation7 + $0x40] sm:$0xff]
    %v245 = vld [vmem:[#allocation7 + $0x48] sm:$0xff]
    %v246 = vld [vmem:[#allocation7 + $0x50] sm:$0xff]
    %v247 = vld [vmem:[#allocation7 + $0x58] sm:$0xff]
    %v248 = vld [vmem:[#allocation7 + $0x60] sm:$0xff]
    %v249 = vld [vmem:[#allocation7 + $0x68] sm:$0xff]
    %v250 = vld [vmem:[#allocation7 + $0x70] sm:$0xff]
    %v251 = vld [vmem:[#allocation7 + $0x78] sm:$0xff]
    %v252 = vld [vmem:[#allocation7 + $0x80] sm:$0xff]
    %v253 = vld [vmem:[#allocation7 + $0x88] sm:$0xff]
    %v254 = vld [vmem:[#allocation7 + $0x90] sm:$0xff]
    %v255 = vld [vmem:[#allocation7 + $0x98] sm:$0xff]
    %v256 = vld [vmem:[#allocation7 + $0xa0] sm:$0xff]
    %v257 = vld [vmem:[#allocation7 + $0xa8] sm:$0xff]
    %v258 = vld [vmem:[#allocation7 + $0xb0] sm:$0xff]
    %v259 = vld [vmem:[#allocation7 + $0xb8] sm:$0xff]
    %v260 = vld [vmem:[#allocation7 + $0xc0] sm:$0xff]
    %v261 = vld [vmem:[#allocation7 + $0xc8] sm:$0xff]
    %v262 = vld [vmem:[#allocation7 + $0xd0] sm:$0xff]
    %v263 = vld [vmem:[#allocation7 + $0xd8] sm:$0xff]
    %v264 = vld [vmem:[#allocation7 + $0xe0] sm:$0xff]
    %v265 = vld [vmem:[#allocation7 + $0xe8] sm:$0xff]
    %v266 = vld [vmem:[#allocation7 + $0xf0] sm:$0xff]
    %v267 = vld [vmem:[#allocation7 + $0xf8] sm:$0xff]
    %v268 = vld [vmem:[%s4] sm:$0x3]
    %v270 = vlaneseq
    %v271 = vshrl.u32 %v270, 7
    %v272 = vsub.s32 0, %v271
    %v273 = vrot.slane %v268, %v272
    %v274 = vlaneseq
    %v275 = vshrl.u32 %v274, 7
    %v276 = vsub.s32 1, %v275
    %v277 = vrot.slane %v268, %v276
    %v312 = vunpack.c.l.b16 %v236
    %v313 = vunpack.c.h.b16 %v236
    %v314 = vunpack.c.l.b16 %v237
    %v315 = vunpack.c.h.b16 %v237
    %v316 = vunpack.c.l.b16 %v238
    %v317 = vunpack.c.h.b16 %v238
    %v318 = vunpack.c.l.b16 %v239
    %v319 = vunpack.c.h.b16 %v239
    %v320 = vunpack.c.l.b16 %v240
    %v321 = vunpack.c.h.b16 %v240
    %v322 = vunpack.c.l.b16 %v241
    %v323 = vunpack.c.h.b16 %v241
    %v324 = vunpack.c.l.b16 %v242
    %v325 = vunpack.c.h.b16 %v242
    %v326 = vunpack.c.l.b16 %v243
    %v327 = vunpack.c.h.b16 %v243
    %v328 = vunpack.c.l.b16 %v244
    %v329 = vunpack.c.h.b16 %v244
    %v330 = vunpack.c.l.b16 %v245
    %v331 = vunpack.c.h.b16 %v245
    %v332 = vunpack.c.l.b16 %v246
    %v333 = vunpack.c.h.b16 %v246
    %v334 = vunpack.c.l.b16 %v247
    %v335 = vunpack.c.h.b16 %v247
    %v336 = vunpack.c.l.b16 %v248
    %v337 = vunpack.c.h.b16 %v248
    %v338 = vunpack.c.l.b16 %v249
    %v339 = vunpack.c.h.b16 %v249
    %v340 = vunpack.c.l.b16 %v250
    %v341 = vunpack.c.h.b16 %v250
    %v342 = vunpack.c.l.b16 %v251
    %v343 = vunpack.c.h.b16 %v251
    %v344 = vunpack.c.l.b16 %v252
    %v345 = vunpack.c.h.b16 %v252
    %v346 = vunpack.c.l.b16 %v253
    %v347 = vunpack.c.h.b16 %v253
    %v348 = vunpack.c.l.b16 %v254
    %v349 = vunpack.c.h.b16 %v254
    %v350 = vunpack.c.l.b16 %v255
    %v351 = vunpack.c.h.b16 %v255
    %v352 = vunpack.c.l.b16 %v256
    %v353 = vunpack.c.h.b16 %v256
    %v354 = vunpack.c.l.b16 %v257
    %v355 = vunpack.c.h.b16 %v257
    %v356 = vunpack.c.l.b16 %v258
    %v357 = vunpack.c.h.b16 %v258
    %v358 = vunpack.c.l.b16 %v259
    %v359 = vunpack.c.h.b16 %v259
    %v360 = vunpack.c.l.b16 %v260
    %v361 = vunpack.c.h.b16 %v260
    %v362 = vunpack.c.l.b16 %v261
    %v363 = vunpack.c.h.b16 %v261
    %v364 = vunpack.c.l.b16 %v262
    %v365 = vunpack.c.h.b16 %v262
    %v366 = vunpack.c.l.b16 %v263
    %v367 = vunpack.c.h.b16 %v263
    %v368 = vunpack.c.l.b16 %v264
    %v369 = vunpack.c.h.b16 %v264
    %v370 = vunpack.c.l.b16 %v265
    %v371 = vunpack.c.h.b16 %v265
    %v372 = vunpack.c.l.b16 %v266
    %v373 = vunpack.c.h.b16 %v266
    %v374 = vunpack.c.l.b16 %v267
    %v375 = vunpack.c.h.b16 %v267
    %v376 = vpack.c.b16 %v314, %v312
    %v377 = vpack.c.b16 %v315, %v313
    %v378 = vpack.c.b16 %v318, %v316
    %v379 = vpack.c.b16 %v319, %v317
    %v380 = vpack.c.b16 %v322, %v320
    %v381 = vpack.c.b16 %v323, %v321
    %v382 = vpack.c.b16 %v326, %v324
    %v383 = vpack.c.b16 %v327, %v325
    %v384 = vpack.c.b16 %v330, %v328
    %v385 = vpack.c.b16 %v331, %v329
    %v386 = vpack.c.b16 %v334, %v332
    %v387 = vpack.c.b16 %v335, %v333
    %v388 = vpack.c.b16 %v338, %v336
    %v389 = vpack.c.b16 %v339, %v337
    %v390 = vpack.c.b16 %v342, %v340
    %v391 = vpack.c.b16 %v343, %v341
    %v392 = vpack.c.b16 %v346, %v344
    %v393 = vpack.c.b16 %v347, %v345
    %v394 = vpack.c.b16 %v350, %v348
    %v395 = vpack.c.b16 %v351, %v349
    %v396 = vpack.c.b16 %v354, %v352
    %v397 = vpack.c.b16 %v355, %v353
    %v398 = vpack.c.b16 %v358, %v356
    %v399 = vpack.c.b16 %v359, %v357
    %v400 = vpack.c.b16 %v362, %v360
    %v401 = vpack.c.b16 %v363, %v361
    %v402 = vpack.c.b16 %v366, %v364
    %v403 = vpack.c.b16 %v367, %v365
    %v404 = vpack.c.b16 %v370, %v368
    %v405 = vpack.c.b16 %v371, %v369
    %v406 = vpack.c.b16 %v374, %v372
    %v407 = vpack.c.b16 %v375, %v373
    %440 = vmatprep.subr.bf16.mxu0 %v391
    %441 = vmatpush1.bf16.msra.mxu0 %v390
    %442 = vmatprep.subr.bf16.mxu0 %v389
    %443 = vmatpush1.bf16.msra.mxu0 %v388
    %444 = vmatprep.subr.bf16.mxu0 %v387
    %445 = vmatpush1.bf16.msra.mxu0 %v386
    %446 = vmatprep.subr.bf16.mxu0 %v385
    %447 = vmatpush1.bf16.msra.mxu0 %v384
    %448 = vmatprep.subr.bf16.mxu0 %v383
    %449 = vmatpush1.bf16.msra.mxu0 %v382
    %450 = vmatprep.subr.bf16.mxu0 %v381
    %451 = vmatpush1.bf16.msra.mxu0 %v380
    %452 = vmatprep.subr.bf16.mxu0 %v379
    %453 = vmatpush1.bf16.msra.mxu0 %v378
    %454 = vmatprep.subr.bf16.mxu0 %v377
    %455 = vmatpush1.bf16.msra.mxu0 %v376
    %456 = vmatprep.subr.bf16.mxu0 %v407
    %457 = vmatpush2.bf16.msra.mxu0 %v406
    %458 = vmatprep.subr.bf16.mxu0 %v405
    %459 = vmatpush2.bf16.msra.mxu0 %v404
    %460 = vmatprep.subr.bf16.mxu0 %v403
    %461 = vmatpush2.bf16.msra.mxu0 %v402
    %462 = vmatprep.subr.bf16.mxu0 %v401
    %463 = vmatpush2.bf16.msra.mxu0 %v400
    %464 = vmatprep.subr.bf16.mxu0 %v399
    %465 = vmatpush2.bf16.msra.mxu0 %v398
    %466 = vmatprep.subr.bf16.mxu0 %v397
    %467 = vmatpush2.bf16.msra.mxu0 %v396
    %468 = vmatprep.subr.bf16.mxu0 %v395
    %469 = vmatpush2.bf16.msra.mxu0 %v394
    %470 = vmatprep.subr.bf16.mxu0 %v393
    %471 = vmatpush2.bf16.msra.mxu0 %v392
    %472 = vmatprep.mubr.bf16.mxu0 %v235
    %473 = vmatmul.mubr.bf16.gmra.mxu0 %v234
    %v474 = vpop.f32.mrf.mxu0
    %v475 = vadd.f32 %v273, %v474
    %v476 = vpop.f32.mrf.mxu0
    %v477 = vadd.f32 %v277, %v476
    %v478 = vpop.f32.mrf.mxu0
    %v479 = vpop.f32.mrf.mxu0
    %480 = vdwg.mxu0
    %v481 = vmax.f32 %v475, 0.0
    %v482 = vmax.f32 %v477, 0.0
    %v483 = vpack.c.bf16 %v481, %v481
    %v484 = vpack.c.bf16 %v482, %v482
    %v485 = vld [vmem:[#allocation8] sm:$0xf]
    %v486 = vld [vmem:[#allocation8 + $0x4] sm:$0xf]
    %v487 = vld [vmem:[#allocation8 + $0x8] sm:$0xf]
    %v488 = vld [vmem:[#allocation8 + $0xc] sm:$0xf]
    %v489 = vld [vmem:[#allocation8 + $0x10] sm:$0xf]
    %v490 = vld [vmem:[#allocation8 + $0x14] sm:$0xf]
    %v491 = vld [vmem:[#allocation8 + $0x18] sm:$0xf]
    %v492 = vld [vmem:[#allocation8 + $0x1c] sm:$0xf]
    %v493 = vld [vmem:[#allocation8 + $0x20] sm:$0xf]
    %v494 = vld [vmem:[#allocation8 + $0x24] sm:$0xf]
    %v495 = vld [vmem:[#allocation8 + $0x28] sm:$0xf]
    %v496 = vld [vmem:[#allocation8 + $0x2c] sm:$0xf]
    %v497 = vld [vmem:[#allocation8 + $0x30] sm:$0xf]
    %v498 = vld [vmem:[#allocation8 + $0x34] sm:$0xf]
    %v499 = vld [vmem:[#allocation8 + $0x38] sm:$0xf]
    %v500 = vld [vmem:[#allocation8 + $0x3c] sm:$0xf]
    %v501 = vld [vmem:[#allocation8 + $0x40] sm:$0xf]
    %v502 = vld [vmem:[#allocation8 + $0x44] sm:$0xf]
    %v503 = vld [vmem:[#allocation8 + $0x48] sm:$0xf]
    %v504 = vld [vmem:[#allocation8 + $0x4c] sm:$0xf]
    %v505 = vld [vmem:[#allocation8 + $0x50] sm:$0xf]
    %v506 = vld [vmem:[#allocation8 + $0x54] sm:$0xf]
    %v507 = vld [vmem:[#allocation8 + $0x58] sm:$0xf]
    %v508 = vld [vmem:[#allocation8 + $0x5c] sm:$0xf]
    %v509 = vld [vmem:[#allocation8 + $0x60] sm:$0xf]
    %v510 = vld [vmem:[#allocation8 + $0x64] sm:$0xf]
    %v511 = vld [vmem:[#allocation8 + $0x68] sm:$0xf]
    %v512 = vld [vmem:[#allocation8 + $0x6c] sm:$0xf]
    %v513 = vld [vmem:[#allocation8 + $0x70] sm:$0xf]
    %v514 = vld [vmem:[#allocation8 + $0x74] sm:$0xf]
    %v515 = vld [vmem:[#allocation8 + $0x78] sm:$0xf]
    %v516 = vld [vmem:[#allocation8 + $0x7c] sm:$0xf]
    %v517 = vld [vmem:[%s6] sm:$0x1]
    %v519 = vlaneseq
    %v520 = vshrl.u32 %v519, 7
    %v521 = vsub.s32 0, %v520
    %v522 = vrot.slane %v517, %v521
    %v556 = vunpack.c.l.b16 %v485
    %v557 = vunpack.c.l.b16 %v486
    %v558 = vunpack.c.l.b16 %v487
    %v559 = vunpack.c.l.b16 %v488
    %v560 = vunpack.c.l.b16 %v489
    %v561 = vunpack.c.l.b16 %v490
    %v562 = vunpack.c.l.b16 %v491
    %v563 = vunpack.c.l.b16 %v492
    %v564 = vunpack.c.l.b16 %v493
    %v565 = vunpack.c.l.b16 %v494
    %v566 = vunpack.c.l.b16 %v495
    %v567 = vunpack.c.l.b16 %v496
    %v568 = vunpack.c.l.b16 %v497
    %v569 = vunpack.c.l.b16 %v498
    %v570 = vunpack.c.l.b16 %v499
    %v571 = vunpack.c.l.b16 %v500
    %v572 = vunpack.c.l.b16 %v501
    %v573 = vunpack.c.l.b16 %v502
    %v574 = vunpack.c.l.b16 %v503
    %v575 = vunpack.c.l.b16 %v504
    %v576 = vunpack.c.l.b16 %v505
    %v577 = vunpack.c.l.b16 %v506
    %v578 = vunpack.c.l.b16 %v507
    %v579 = vunpack.c.l.b16 %v508
    %v580 = vunpack.c.l.b16 %v509
    %v581 = vunpack.c.l.b16 %v510
    %v582 = vunpack.c.l.b16 %v511
    %v583 = vunpack.c.l.b16 %v512
    %v584 = vunpack.c.l.b16 %v513
    %v585 = vunpack.c.l.b16 %v514
    %v586 = vunpack.c.l.b16 %v515
    %v587 = vunpack.c.l.b16 %v516
    %v588 = vpack.c.b16 %v557, %v556
    %v589 = vpack.c.b16 %v559, %v558
    %v590 = vpack.c.b16 %v561, %v560
    %v591 = vpack.c.b16 %v563, %v562
    %v592 = vpack.c.b16 %v565, %v564
    %v593 = vpack.c.b16 %v567, %v566
    %v594 = vpack.c.b16 %v569, %v568
    %v595 = vpack.c.b16 %v571, %v570
    %v596 = vpack.c.b16 %v573, %v572
    %v597 = vpack.c.b16 %v575, %v574
    %v598 = vpack.c.b16 %v577, %v576
    %v599 = vpack.c.b16 %v579, %v578
    %v600 = vpack.c.b16 %v581, %v580
    %v601 = vpack.c.b16 %v583, %v582
    %v602 = vpack.c.b16 %v585, %v584
    %v603 = vpack.c.b16 %v587, %v586
    %620 = vmatprep.subr.bf16.mxu0 0
    %621 = vmatpush1.bf16.msra.mxu0 %v595
    %622 = vmatprep.subr.bf16.mxu0 0
    %623 = vmatpush1.bf16.msra.mxu0 %v594
    %624 = vmatprep.subr.bf16.mxu0 0
    %625 = vmatpush1.bf16.msra.mxu0 %v593
    %626 = vmatprep.subr.bf16.mxu0 0
    %627 = vmatpush1.bf16.msra.mxu0 %v592
    %628 = vmatprep.subr.bf16.mxu0 0
    %629 = vmatpush1.bf16.msra.mxu0 %v591
    %630 = vmatprep.subr.bf16.mxu0 0
    %631 = vmatpush1.bf16.msra.mxu0 %v590
    %632 = vmatprep.subr.bf16.mxu0 0
    %633 = vmatpush1.bf16.msra.mxu0 %v589
    %634 = vmatprep.subr.bf16.mxu0 0
    %635 = vmatpush1.bf16.msra.mxu0 %v588
    %636 = vmatprep.subr.bf16.mxu0 0
    %637 = vmatpush2.bf16.msra.mxu0 %v603
    %638 = vmatprep.subr.bf16.mxu0 0
    %639 = vmatpush2.bf16.msra.mxu0 %v602
    %640 = vmatprep.subr.bf16.mxu0 0
    %641 = vmatpush2.bf16.msra.mxu0 %v601
    %642 = vmatprep.subr.bf16.mxu0 0
    %643 = vmatpush2.bf16.msra.mxu0 %v600
    %644 = vmatprep.subr.bf16.mxu0 0
    %645 = vmatpush2.bf16.msra.mxu0 %v599
    %646 = vmatprep.subr.bf16.mxu0 0
    %647 = vmatpush2.bf16.msra.mxu0 %v598
    %648 = vmatprep.subr.bf16.mxu0 0
    %649 = vmatpush2.bf16.msra.mxu0 %v597
    %650 = vmatprep.subr.bf16.mxu0 0
    %651 = vmatpush2.bf16.msra.mxu0 %v596
    %652 = vmatprep.mubr.bf16.mxu0 %v484
    %653 = vmatmul.mubr.bf16.gmra.mxu0 %v483
    %v654 = vpop.f32.mrf.mxu0
    %v655 = vadd.f32 %v522, %v654
    %v656 = vpop.f32.mrf.mxu0
    %v657 = vpop.f32.mrf.mxu0
    %v658 = vpop.f32.mrf.mxu0
    %659 = vdwg.mxu0
    %660 = vmax.xlane.f32.xlu0 %v655
    %v661 = vpop.xlane.xlu0 %660
    %v662 = vsub.f32 %v655, %v661
    %v663 = vmul.f32 %v662, 1.442695
    %v664 = vpow.pop %v663
    %665 = vadd.xlane.f32.xlu0 %v664
    %v666 = vpop.xlane.xlu0 %665
    %v667 = vrcp.pop %v666
    %v668 = vmul.f32 %v664, %v667
    %669 = vst [vmem:[#allocation10] sm:$0xff] %v668
    // Predicated region
    $region46: #{tpu_custom_call.1} parent=1 // pred_check
      _
    $region47: #{tpu_custom_call.1} parent=1 // pred_check_branch
      %671 = sbr.rel (0) target = $region49
    $region48: #{tpu_custom_call.1} parent=1 // pred_region
      %s673 = ssub.s32 128, 128
      %674 = vsyncadd [#allocation4], %s673
      %s676 = sshll.u32 [#allocation10], 4
      %s677 = int_to_ptr.vmem [resolvable:$true] %s676
      %679 = dma.vmem_to_hbm [thread:$0]  %s677, 128, %s7, [#allocation4]
    $region49: #{tpu_custom_call.1} parent=1 // pred_fallthru
      _
    // Predicated region
    $region50: #{tpu_custom_call.1} parent=1 // pred_check
      _
    $region51: #{tpu_custom_call.1} parent=1 // pred_check_branch
      %681 = sbr.rel (0) target = $region53
    $region52: #{tpu_custom_call.1} parent=1 // pred_region
      %682 = dma.done [#allocation4], 128
    $region53: #{tpu_custom_call.1} parent=1 // pred_fallthru
      _
    %683 = vsyncpa [#allocation3], 1
    %684 = vsyncpa [#allocation6], 1
    %685 = vsyncpa [#allocation9], 1
    %686 = vsyncpa [#allocation4], 1

</llo_original>
